<compile_context>
chip_gen: v7x
topology: tpu7x:2x2x1
jax: 0.10.0
libtpu: 0.0.40
codegen_flags: <defaults>
</compile_context>

<pallas_src>
from math import sqrt

import jax
import jax.numpy as jnp
from jax.experimental import pallas as pl
from jax.experimental.pallas import tpu as pltpu


def _round_up(x, m):
    return ((x + m - 1) // m) * m


def actor_kernel(ma_ref, s_ref, w1_ref, b1_ref, w2_ref, b2_ref, w3_ref, b3_ref,
                 o_ref):
    """One batch tile of the Actor MLP.

    Layer 1 runs fully in f32 (K = state_dim is tiny); layers 2/3 use bf16
    weights and bf16 activations with f32 accumulation on the MXU.
    """
    max_action = ma_ref[0, 0]                            # SMEM scalar
    x = s_ref[...]                                       # (tm, state_dim) f32
    h = jnp.dot(x, w1_ref[...], preferred_element_type=jnp.float32) + b1_ref[...]
    h = jnp.maximum(h, 0.0)                              # ReLU (f32)
    h = jnp.dot(h.astype(jnp.bfloat16), w2_ref[...],
                preferred_element_type=jnp.float32) + b2_ref[...]
    h = jnp.maximum(h, 0.0)                              # ReLU (f32)
    h = jnp.dot(h.astype(jnp.bfloat16), w3_ref[...],
                preferred_element_type=jnp.float32) + b3_ref[...]
    o_ref[...] = (jnp.tanh(h) * max_action).astype(o_ref.dtype)


def prepare_actor(params, max_action):
    """One-time prep (run at parameter-update time, NOT per forward call):
    layer-1 weight stays f32, layers 2/3 weights are cast to bf16 (halves
    their DMA bytes, 2x MXU rate), and max_action is packed as a (1,1) f32
    scalar for SMEM so changing its value never forces a recompile."""
    w1, b1, w2, b2, w3, b3 = params
    return (jnp.asarray(w1, jnp.float32), jnp.asarray(b1, jnp.float32),
            jnp.asarray(w2, jnp.bfloat16), jnp.asarray(b2, jnp.float32),
            jnp.asarray(w3, jnp.bfloat16), jnp.asarray(b3, jnp.float32),
            jnp.full((1, 1), max_action, dtype=jnp.float32))


@jax.jit
def actor_forward(state, prepared):
    """state: [B, state_dim] f32 -> [B, action_dim] f32 == tanh(MLP(state)) * max_action."""
    w1, b1, w2, b2, w3, b3, ma = prepared
    B, state_dim = state.shape
    hidden = w1.shape[1]
    action_dim = w3.shape[1]

    # --- batch tiling -------------------------------------------------------
    # Tile rows are a multiple of 8 (f32 sublane).  For batches beyond a
    # couple of sublanes, split into >= 2 grid steps (engages both v7x TCs)
    # and cap the tile at 1024 rows (keeps VMEM < ~4 MiB, well inside the
    # default scoped limit on v5e/v6e/v7x; if this cap is ever raised past
    # ~2048, set vmem_limit_bytes explicitly — v5e defaults to 16 MiB scoped).
    b_round = _round_up(B, 8)
    if b_round <= 16:
        tm = b_round
    else:
        tm = min(1024, _round_up((b_round + 1) // 2, 8))
    n_tiles = pl.cdiv(B, tm)

    # Ragged last tile: no wrapper-side jnp.pad — Pallas clips the OOB rows of
    # the final input block and masks the OOB rows of the final output block.
    resident = lambda shape: pl.BlockSpec(shape, lambda i: (0,) * len(shape))

    cost = pl.CostEstimate(
        flops=2 * B * (state_dim * hidden + hidden * hidden + hidden * action_dim),
        transcendentals=B * action_dim,                          # tanh on the real head
        bytes_accessed=(w1.size + b1.size + b2.size + b3.size) * 4   # f32 operands
        + (w2.size + w3.size) * 2                                    # bf16 weights
        + state.size * 4 + B * action_dim * 4,                       # state + output
    )

    out = pl.pallas_call(
        actor_kernel,
        out_shape=jax.ShapeDtypeStruct((B, action_dim), jnp.float32),
        grid=(n_tiles,),
        in_specs=[
            pl.BlockSpec(memory_space=pltpu.MemorySpace.SMEM),    # max_action scalar
            pl.BlockSpec((tm, state_dim), lambda i: (i, 0)),      # state batch tile
            resident(w1.shape), resident(b1.shape),               # weights/biases stay
            resident(w2.shape), resident(b2.shape),               # VMEM-resident
            resident(w3.shape), resident(b3.shape),               # (DMA'd once)
        ],
        out_specs=pl.BlockSpec((tm, action_dim), lambda i: (i, 0)),
        compiler_params=pltpu.CompilerParams(
            dimension_semantics=("parallel",),   # shard batch tiles across v7x's 2 TCs
        ),
        cost_estimate=cost,
    )(ma, state, w1, b1, w2, b2, w3, b3)

    return out


def init_actor_params(key, state_dim, action_dim, hidden=256, init_w=None):
    """Deterministic init mimicking PyTorch nn.Linear defaults:
    uniform(-1/sqrt(fan_in), 1/sqrt(fan_in)) for weight and bias.
    If init_w is given, the head layer uses uniform(-init_w, init_w)."""
    ks = jax.random.split(key, 6)

    def linear(kw, kb, fan_in, fan_out, bound):
        w = jax.random.uniform(kw, (fan_in, fan_out), jnp.float32, -bound, bound)
        b = jax.random.uniform(kb, (1, fan_out), jnp.float32, -bound, bound)
        return w, b

    w1, b1 = linear(ks[0], ks[1], state_dim, hidden, 1.0 / sqrt(state_dim))
    w2, b2 = linear(ks[2], ks[3], hidden, hidden, 1.0 / sqrt(hidden))
    head_bound = init_w if init_w is not None else 1.0 / sqrt(hidden)
    w3, b3 = linear(ks[4], ks[5], hidden, action_dim, head_bound)
    return (w1, b1, w2, b2, w3, b3)


def actor_reference(state, params, max_action):
    """Pure f32 reference (matches the PyTorch module semantics)."""
    w1, b1, w2, b2, w3, b3 = params
    h = jnp.maximum(state @ w1 + b1, 0.0)
    h = jnp.maximum(h @ w2 + b2, 0.0)
    return jnp.tanh(h @ w3 + b3) * max_action


if __name__ == "__main__":
    # Shapes consistent with the module: Actor(state_dim=32, action_dim=8, max_action=2.0)
    state_dim, action_dim, hidden = 32, 8, 256
    max_action = 2.0

    key = jax.random.PRNGKey(0)
    k_small, k_large, k_params = jax.random.split(key, 3)
    params = init_actor_params(k_params, state_dim, action_dim, hidden=hidden, init_w=None)
    prepared = prepare_actor(params, max_action)   # hoisted: once per param update

    # Small inference-style batch (single tile) and a larger multi-tile batch
    # that exercises the >=2-step grid and the ragged-last-tile masking.
    for B, k_state in ((2, k_small), (300, k_large)):
        state = jax.random.normal(k_state, (B, state_dim), dtype=jnp.float32)
        out = jax.block_until_ready(actor_forward(state, prepared))
        ref = actor_reference(state, params, max_action)
        assert out.shape == (B, action_dim)
        # bf16 weights/activations in layers 2-3 with f32 accumulation ->
        # bf16-level tolerance vs the f32 reference.
        assert jnp.allclose(out, ref, atol=5e-2, rtol=5e-2), f"mismatch vs reference at B={B}"

    print("KERNEL_OK")
</pallas_src>

<mosaic_0001>
module attributes {stable_mosaic.version = 11 : i64} {
  func.func @actor_kernel(%arg0: i32, %arg1: memref<1x1xf32, #tpu.memory_space<smem>>, %arg2: memref<8x32xf32, #tpu.memory_space<vmem>>, %arg3: memref<32x256xf32, #tpu.memory_space<vmem>>, %arg4: memref<1x256xf32, #tpu.memory_space<vmem>>, %arg5: memref<256x256xbf16, #tpu.memory_space<vmem>>, %arg6: memref<1x256xf32, #tpu.memory_space<vmem>>, %arg7: memref<256x8xbf16, #tpu.memory_space<vmem>>, %arg8: memref<1x8xf32, #tpu.memory_space<vmem>>, %arg9: memref<8x8xf32, #tpu.memory_space<vmem>>) attributes {dimension_semantics = [#tpu.dimension_semantics<parallel>], iteration_bounds = array<i64: 1>, scalar_prefetch = 0 : i64, scratch_operands = 0 : i64, tpu.core_type = #tpu.core_type<tc>, window_params = [{transform_indices = @transform_0, window_bounds = array<i64: 1, 1>}, {transform_indices = @transform_1, window_bounds = array<i64: 8, 32>}, {pipeline_mode = #tpu.pipeline_mode<synchronous>, transform_indices = @transform_2, window_bounds = array<i64: 32, 256>}, {pipeline_mode = #tpu.pipeline_mode<synchronous>, transform_indices = @transform_3, window_bounds = array<i64: 1, 256>}, {pipeline_mode = #tpu.pipeline_mode<synchronous>, transform_indices = @transform_4, window_bounds = array<i64: 256, 256>}, {pipeline_mode = #tpu.pipeline_mode<synchronous>, transform_indices = @transform_5, window_bounds = array<i64: 1, 256>}, {pipeline_mode = #tpu.pipeline_mode<synchronous>, transform_indices = @transform_6, window_bounds = array<i64: 256, 8>}, {pipeline_mode = #tpu.pipeline_mode<synchronous>, transform_indices = @transform_7, window_bounds = array<i64: 1, 8>}, {transform_indices = @transform_8, window_bounds = array<i64: 8, 8>}]} {
    %c0 = arith.constant 0 : index
    %c0_0 = arith.constant 0 : index
    %0 = memref.load %arg1[%c0, %c0_0] : memref<1x1xf32, #tpu.memory_space<smem>>
    %c0_1 = arith.constant 0 : index
    %c0_2 = arith.constant 0 : index
    %1 = vector.load %arg2[%c0_1, %c0_2] : memref<8x32xf32, #tpu.memory_space<vmem>>, vector<8x32xf32>
    %c0_3 = arith.constant 0 : index
    %c0_4 = arith.constant 0 : index
    %2 = vector.load %arg3[%c0_3, %c0_4] : memref<32x256xf32, #tpu.memory_space<vmem>>, vector<32x256xf32>
    %cst = arith.constant dense<0.000000e+00> : vector<8x256xf32>
    %3 = tpu.matmul %1, %2, %cst {dimension_numbers = #tpu.dot_dimension_numbers<[1], [0], [0], [1], [0, 0, 1, 1], [], []>} : vector<8x32xf32>, vector<32x256xf32>, vector<8x256xf32> -> vector<8x256xf32>
    %c0_5 = arith.constant 0 : index
    %c0_6 = arith.constant 0 : index
    %4 = vector.load %arg4[%c0_5, %c0_6] : memref<1x256xf32, #tpu.memory_space<vmem>>, vector<1x256xf32>
    %5 = vector.broadcast %4 : vector<1x256xf32> to vector<8x256xf32>
    %6 = arith.addf %3, %5 : vector<8x256xf32>
    %cst_7 = arith.constant 0.000000e+00 : f32
    %7 = vector.broadcast %cst_7 : f32 to vector<8x256xf32>
    %8 = arith.maximumf %6, %7 : vector<8x256xf32>
    %9 = arith.truncf %8 : vector<8x256xf32> to vector<8x256xbf16>
    %c0_8 = arith.constant 0 : index
    %c0_9 = arith.constant 0 : index
    %10 = vector.load %arg5[%c0_8, %c0_9] : memref<256x256xbf16, #tpu.memory_space<vmem>>, vector<256x256xbf16>
    %cst_10 = arith.constant dense<0.000000e+00> : vector<8x256xf32>
    %11 = tpu.matmul %9, %10, %cst_10 {dimension_numbers = #tpu.dot_dimension_numbers<[1], [0], [0], [1], [0, 0, 1, 1], [], []>} : vector<8x256xbf16>, vector<256x256xbf16>, vector<8x256xf32> -> vector<8x256xf32>
    %c0_11 = arith.constant 0 : index
    %c0_12 = arith.constant 0 : index
    %12 = vector.load %arg6[%c0_11, %c0_12] : memref<1x256xf32, #tpu.memory_space<vmem>>, vector<1x256xf32>
    %13 = vector.broadcast %12 : vector<1x256xf32> to vector<8x256xf32>
    %14 = arith.addf %11, %13 : vector<8x256xf32>
    %cst_13 = arith.constant 0.000000e+00 : f32
    %15 = vector.broadcast %cst_13 : f32 to vector<8x256xf32>
    %16 = arith.maximumf %14, %15 : vector<8x256xf32>
    %17 = arith.truncf %16 : vector<8x256xf32> to vector<8x256xbf16>
    %c0_14 = arith.constant 0 : index
    %c0_15 = arith.constant 0 : index
    %18 = vector.load %arg7[%c0_14, %c0_15] : memref<256x8xbf16, #tpu.memory_space<vmem>>, vector<256x8xbf16>
    %cst_16 = arith.constant dense<0.000000e+00> : vector<8x8xf32>
    %19 = tpu.matmul %17, %18, %cst_16 {dimension_numbers = #tpu.dot_dimension_numbers<[1], [0], [0], [1], [0, 0, 1, 1], [], []>} : vector<8x256xbf16>, vector<256x8xbf16>, vector<8x8xf32> -> vector<8x8xf32>
    %c0_17 = arith.constant 0 : index
    %c0_18 = arith.constant 0 : index
    %20 = vector.load %arg8[%c0_17, %c0_18] : memref<1x8xf32, #tpu.memory_space<vmem>>, vector<1x8xf32>
    %21 = vector.broadcast %20 : vector<1x8xf32> to vector<8x8xf32>
    %22 = arith.addf %19, %21 : vector<8x8xf32>
    %23 = math.tanh %22 : vector<8x8xf32>
    %24 = vector.broadcast %0 : f32 to vector<8x8xf32>
    %25 = arith.mulf %23, %24 : vector<8x8xf32>
    %c0_19 = arith.constant 0 : index
    %c0_20 = arith.constant 0 : index
    %26 = vector.load %arg9[%c0_19, %c0_20] : memref<8x8xf32, #tpu.memory_space<vmem>>, vector<8x8xf32>
    tpu.vector_store %arg9[%c0_19, %c0_20], %25 {strides = array<i32>} : memref<8x8xf32, #tpu.memory_space<vmem>>, vector<8x8xf32>,
    return
  }
  func.func @transform_0(%arg0: i32) -> (i32, i32) {
    %c0_i32 = arith.constant 0 : i32
    %c0_i32_0 = arith.constant 0 : i32
    %c0_i32_1 = arith.constant 0 : i32
    return %c0_i32, %c0_i32_0 : i32, i32
  }
  func.func @transform_1(%arg0: i32) -> (i32, i32) {
    %c0_i32 = arith.constant 0 : i32
    %c0_i32_0 = arith.constant 0 : i32
    return %arg0, %c0_i32 : i32, i32
  }
  func.func @transform_2(%arg0: i32) -> (i32, i32) {
    %c0_i32 = arith.constant 0 : i32
    %c0_i32_0 = arith.constant 0 : i32
    %c0_i32_1 = arith.constant 0 : i32
    return %c0_i32, %c0_i32_0 : i32, i32
  }
  func.func @transform_3(%arg0: i32) -> (i32, i32) {
    %c0_i32 = arith.constant 0 : i32
    %c0_i32_0 = arith.constant 0 : i32
    %c0_i32_1 = arith.constant 0 : i32
    return %c0_i32, %c0_i32_0 : i32, i32
  }
  func.func @transform_4(%arg0: i32) -> (i32, i32) {
    %c0_i32 = arith.constant 0 : i32
    %c0_i32_0 = arith.constant 0 : i32
    %c0_i32_1 = arith.constant 0 : i32
    return %c0_i32, %c0_i32_0 : i32, i32
  }
  func.func @transform_5(%arg0: i32) -> (i32, i32) {
    %c0_i32 = arith.constant 0 : i32
    %c0_i32_0 = arith.constant 0 : i32
    %c0_i32_1 = arith.constant 0 : i32
    return %c0_i32, %c0_i32_0 : i32, i32
  }
  func.func @transform_6(%arg0: i32) -> (i32, i32) {
    %c0_i32 = arith.constant 0 : i32
    %c0_i32_0 = arith.constant 0 : i32
    %c0_i32_1 = arith.constant 0 : i32
    return %c0_i32, %c0_i32_0 : i32, i32
  }
  func.func @transform_7(%arg0: i32) -> (i32, i32) {
    %c0_i32 = arith.constant 0 : i32
    %c0_i32_0 = arith.constant 0 : i32
    %c0_i32_1 = arith.constant 0 : i32
    return %c0_i32, %c0_i32_0 : i32, i32
  }
  func.func @transform_8(%arg0: i32) -> (i32, i32) {
    %c0_i32 = arith.constant 0 : i32
    %c0_i32_0 = arith.constant 0 : i32
    return %arg0, %c0_i32 : i32, i32
  }
}

</mosaic_0001>

<llo_original>
// kernel: actor_forward.1
$region0: #{actor_forward.1}
  #allocation0 [shape = 'u32[]', space=smem, size = 0x4, offset = 0x4, fixed_abs, tag = 'smem constant byte address 0x4 - core index']
  #allocation1 [shape = 'u32[144,128]{1,0:T(1,128)}', space=vmem, size = 0x12000, scoped, tag = 'internal scratch']
  #allocation2 [shape = 'f32[1,1]{1,0:T(1,128)S(6)}', space=smem, size = 0x200, scoped, tag = 'scoped memory for actor_forward.1']
  %s0 = inlined_call_operand.<no memory space> [shape: f32[1,1], index: 0, kind: input, shape index: {}]
  %s1 = inlined_call_operand.vmem [shape: f32[2,32], index: 1, kind: input, shape index: {}]
  %s2 = inlined_call_operand.vmem [shape: f32[32,256], index: 2, kind: input, shape index: {}]
  %s3 = inlined_call_operand.vmem [shape: f32[1,256], index: 3, kind: input, shape index: {}]
  %s4 = inlined_call_operand.hbm [shape: bf16[256,256], index: 4, kind: input, shape index: {}]
  %s5 = inlined_call_operand.vmem [shape: f32[1,256], index: 5, kind: input, shape index: {}]
  %s6 = inlined_call_operand.vmem [shape: bf16[256,8], index: 6, kind: input, shape index: {}]
  %s7 = inlined_call_operand.vmem [shape: f32[1,8], index: 7, kind: input, shape index: {}]
  %s8 = inlined_call_operand.hbm [shape: f32[2,8], index: 8, kind: output, shape index: {}]
  %s9 = sld [smem:[#allocation0]]
  $region46: #{actor_forward.1} parent=0
    _
  %s11 = ssub.s32 1, %s9
  %s12 = scalar_select 0, %s11, %s9
  %13 = sst [smem:[#allocation2]] %s0
  $region1: #{actor_forward.1} parent=0
    #allocation3 [shape = 'u8[131072]{0}', space=vmem, size = 0x20000, scoped, tag = 'input window, operand 4, single buffered']
    #allocation4 [shape = 's32[1]{0}', space=sflag, size = 0x4, scoped, tag = 'scoped memory for actor_forward.1']
    #allocation5 [shape = 's32[1]{0}', space=sflag, size = 0x4, scoped, tag = 'scoped memory for actor_forward.1']
    #allocation6 [shape = 'u8[4096]{0}', space=vmem, size = 0x1000, scoped, tag = 'output window, operand 0, single buffered']
    %14 = vsyncpa [#allocation4], 0
    %15 = vsyncpa [#allocation5], 0
    // Predicated region
    $region2: #{actor_forward.1} parent=1 // pred_check
      _
    $region3: #{actor_forward.1} parent=1 // pred_check_branch
      %17 = sbr.rel (0) target = $region5
    $region4: #{actor_forward.1} parent=1 // pred_region
      _
    $region5: #{actor_forward.1} parent=1 // pred_fallthru
      _
    // Predicated region
    $region6: #{actor_forward.1} parent=1 // pred_check
      _
    $region7: #{actor_forward.1} parent=1 // pred_check_branch
      %19 = sbr.rel (0) target = $region9
    $region8: #{actor_forward.1} parent=1 // pred_region
      _
    $region9: #{actor_forward.1} parent=1 // pred_fallthru
      _
    // Predicated region
    $region10: #{actor_forward.1} parent=1 // pred_check
      _
    $region11: #{actor_forward.1} parent=1 // pred_check_branch
      %21 = sbr.rel (0) target = $region13
    $region12: #{actor_forward.1} parent=1 // pred_region
      _
    $region13: #{actor_forward.1} parent=1 // pred_fallthru
      _
    // Predicated region
    $region14: #{actor_forward.1} parent=1 // pred_check
      _
    $region15: #{actor_forward.1} parent=1 // pred_check_branch
      %23 = sbr.rel (0) target = $region17
    $region16: #{actor_forward.1} parent=1 // pred_region
      _
    $region17: #{actor_forward.1} parent=1 // pred_fallthru
      _
    // Predicated region
    $region18: #{actor_forward.1} parent=1 // pred_check
      _
    $region19: #{actor_forward.1} parent=1 // pred_check_branch
      %25 = sbr.rel (0) target = $region21
    $region20: #{actor_forward.1} parent=1 // pred_region
      %s27 = ssub.s32 4096, 4096
      %28 = vsyncadd [#allocation4], %s27
      %s29 = sshll.u32 [#allocation3], 4
      %s30 = int_to_ptr.vmem [resolvable:$true] %s29
      %35 = dma.hbm_to_vmem [thread:$0]  %s4, 4096, %s30, [#allocation4], 128, 128, 8
    $region21: #{actor_forward.1} parent=1 // pred_fallthru
      _
    // Predicated region
    $region22: #{actor_forward.1} parent=1 // pred_check
      _
    $region23: #{actor_forward.1} parent=1 // pred_check_branch
      %37 = sbr.rel (0) target = $region25
    $region24: #{actor_forward.1} parent=1 // pred_region
      _
    $region25: #{actor_forward.1} parent=1 // pred_fallthru
      _
    // Predicated region
    $region26: #{actor_forward.1} parent=1 // pred_check
      _
    $region27: #{actor_forward.1} parent=1 // pred_check_branch
      %39 = sbr.rel (0) target = $region29
    $region28: #{actor_forward.1} parent=1 // pred_region
      _
    $region29: #{actor_forward.1} parent=1 // pred_fallthru
      _
    // Predicated region
    $region30: #{actor_forward.1} parent=1 // pred_check
      _
    $region31: #{actor_forward.1} parent=1 // pred_check_branch
      %41 = sbr.rel (0) target = $region33
    $region32: #{actor_forward.1} parent=1 // pred_region
      _
    $region33: #{actor_forward.1} parent=1 // pred_fallthru
      _
    // Predicated region
    $region34: #{actor_forward.1} parent=1 // pred_check
      _
    $region35: #{actor_forward.1} parent=1 // pred_check_branch
      %43 = sbr.rel (0) target = $region37
    $region36: #{actor_forward.1} parent=1 // pred_region
      %44 = dma.done [#allocation4], 4096
    $region37: #{actor_forward.1} parent=1 // pred_fallthru
      _
    %s46 = sld [smem:[#allocation2]]
    %v47 = vld [vmem:[%s1] sm:$0xff]
    %v48 = vld [vmem:[%s2] sm:$0xff]
    %v49 = vld [vmem:[%s2 + $0x8] sm:$0xff]
    %v50 = vld [vmem:[%s2 + $0x10] sm:$0xff]
    %v51 = vld [vmem:[%s2 + $0x18] sm:$0xff]
    %v52 = vld [vmem:[%s2 + $0x20] sm:$0xff]
    %v53 = vld [vmem:[%s2 + $0x28] sm:$0xff]
    %v54 = vld [vmem:[%s2 + $0x30] sm:$0xff]
    %v55 = vld [vmem:[%s2 + $0x38] sm:$0xff]
    %v56 = vld [vmem:[%s3] sm:$0x3]
    %v58 = vlaneseq
    %v59 = vshrl.u32 %v58, 7
    %v60 = vsub.s32 0, %v59
    %v61 = vrot.slane %v56, %v60
    %v62 = vlaneseq
    %v63 = vshrl.u32 %v62, 7
    %v64 = vsub.s32 1, %v63
    %v65 = vrot.slane %v56, %v64
    %vm68 = vcmask 261120
    %v70 = vsel %vm68, %v47, 0
    %72 = vmatprep.subr.mxu0 %v49
    %73 = vmatpush1.msra.mxu0 %v48
    %74 = vmatprep.subr.mxu0 %v51
    %75 = vmatpush1.msra.mxu0 %v50
    %76 = vmatprep.subr.mxu0 %v53
    %77 = vmatpush1.msra.mxu0 %v52
    %78 = vmatprep.subr.mxu0 %v55
    %79 = vmatpush1.msra.mxu0 %v54
    %80 = vmatprep.subr.mxu0 0.0
    %81 = vmatpush1.msra.mxu0 0.0
    %82 = vmatprep.subr.mxu0 0.0
    %83 = vmatpush1.msra.mxu0 0.0
    %84 = vmatprep.subr.mxu0 0.0
    %85 = vmatpush1.msra.mxu0 0.0
    %86 = vmatprep.subr.mxu0 0.0
    %87 = vmatpush1.msra.mxu0 0.0
    %88 = vmatprep.subr.mxu0 0.0
    %89 = vmatpush1.msra.mxu0 0.0
    %90 = vmatprep.subr.mxu0 0.0
    %91 = vmatpush1.msra.mxu0 0.0
    %92 = vmatprep.subr.mxu0 0.0
    %93 = vmatpush1.msra.mxu0 0.0
    %94 = vmatprep.subr.mxu0 0.0
    %95 = vmatpush1.msra.mxu0 0.0
    %96 = vmatprep.subr.mxu0 0.0
    %97 = vmatpush1.msra.mxu0 0.0
    %98 = vmatprep.subr.mxu0 0.0
    %99 = vmatpush1.msra.mxu0 0.0
    %100 = vmatprep.subr.mxu0 0.0
    %101 = vmatpush1.msra.mxu0 0.0
    %102 = vmatprep.subr.mxu0 0.0
    %103 = vmatpush1.msra.mxu0 0.0
    %104 = vmatprep.subr.mxu0 0.0
    %105 = vmatpush1.msra.mxu0 0.0
    %106 = vmatprep.subr.mxu0 0.0
    %107 = vmatpush1.msra.mxu0 0.0
    %108 = vmatprep.subr.mxu0 0.0
    %109 = vmatpush1.msra.mxu0 0.0
    %110 = vmatprep.subr.mxu0 0.0
    %111 = vmatpush1.msra.mxu0 0.0
    %112 = vmatprep.subr.mxu0 0.0
    %113 = vmatpush1.msra.mxu0 0.0
    %114 = vmatprep.subr.mxu0 0.0
    %115 = vmatpush1.msra.mxu0 0.0
    %116 = vmatprep.subr.mxu0 0.0
    %117 = vmatpush1.msra.mxu0 0.0
    %118 = vmatprep.subr.mxu0 0.0
    %119 = vmatpush1.msra.mxu0 0.0
    %120 = vmatprep.subr.mxu0 0.0
    %121 = vmatpush1.msra.mxu0 0.0
    %122 = vmatprep.subr.mxu0 0.0
    %123 = vmatpush1.msra.mxu0 0.0
    %124 = vmatprep.subr.mxu0 0.0
    %125 = vmatpush1.msra.mxu0 0.0
    %126 = vmatprep.subr.mxu0 0.0
    %127 = vmatpush1.msra.mxu0 0.0
    %128 = vmatprep.subr.mxu0 0.0
    %129 = vmatpush1.msra.mxu0 0.0
    %130 = vmatprep.subr.mxu0 0.0
    %131 = vmatpush1.msra.mxu0 0.0
    %132 = vmatprep.subr.mxu0 0.0
    %133 = vmatpush1.msra.mxu0 0.0
    %134 = vmatprep.subr.mxu0 0.0
    %135 = vmatpush1.msra.mxu0 0.0
    %136 = vmatprep.mubr.f32.mxu0 0.0
    %137 = vmatmul.mubr.f32.gmra.mrb[0].mxu0 %v70
    %v138 = vpop.f32.mrb[0].mxu0
    %v139 = vadd.f32 %v61, %v138
    %v140 = vpop.f32.mrb[0].mxu0
    %v141 = vadd.f32 %v65, %v140
    %142 = vdwg.mxu0
    %v143 = vmax.f32 %v139, 0.0
    %v144 = vmax.f32 %v141, 0.0
    %v145 = vpack.c.bf16 %v143, %v143
    %v146 = vpack.c.bf16 %v144, %v144
    %v147 = vld [vmem:[#allocation3] sm:$0xff]
    %v148 = vld [vmem:[#allocation3 + $0x8] sm:$0xff]
    %v149 = vld [vmem:[#allocation3 + $0x10] sm:$0xff]
    %v150 = vld [vmem:[#allocation3 + $0x18] sm:$0xff]
    %v151 = vld [vmem:[#allocation3 + $0x20] sm:$0xff]
    %v152 = vld [vmem:[#allocation3 + $0x28] sm:$0xff]
    %v153 = vld [vmem:[#allocation3 + $0x30] sm:$0xff]
    %v154 = vld [vmem:[#allocation3 + $0x38] sm:$0xff]
    %v155 = vld [vmem:[#allocation3 + $0x40] sm:$0xff]
    %v156 = vld [vmem:[#allocation3 + $0x48] sm:$0xff]
    %v157 = vld [vmem:[#allocation3 + $0x50] sm:$0xff]
    %v158 = vld [vmem:[#allocation3 + $0x58] sm:$0xff]
    %v159 = vld [vmem:[#allocation3 + $0x60] sm:$0xff]
    %v160 = vld [vmem:[#allocation3 + $0x68] sm:$0xff]
    %v161 = vld [vmem:[#allocation3 + $0x70] sm:$0xff]
    %v162 = vld [vmem:[#allocation3 + $0x78] sm:$0xff]
    %v163 = vld [vmem:[#allocation3 + $0x80] sm:$0xff]
    %v164 = vld [vmem:[#allocation3 + $0x88] sm:$0xff]
    %v165 = vld [vmem:[#allocation3 + $0x90] sm:$0xff]
    %v166 = vld [vmem:[#allocation3 + $0x98] sm:$0xff]
    %v167 = vld [vmem:[#allocation3 + $0xa0] sm:$0xff]
    %v168 = vld [vmem:[#allocation3 + $0xa8] sm:$0xff]
    %v169 = vld [vmem:[#allocation3 + $0xb0] sm:$0xff]
    %v170 = vld [vmem:[#allocation3 + $0xb8] sm:$0xff]
    %v171 = vld [vmem:[#allocation3 + $0xc0] sm:$0xff]
    %v172 = vld [vmem:[#allocation3 + $0xc8] sm:$0xff]
    %v173 = vld [vmem:[#allocation3 + $0xd0] sm:$0xff]
    %v174 = vld [vmem:[#allocation3 + $0xd8] sm:$0xff]
    %v175 = vld [vmem:[#allocation3 + $0xe0] sm:$0xff]
    %v176 = vld [vmem:[#allocation3 + $0xe8] sm:$0xff]
    %v177 = vld [vmem:[#allocation3 + $0xf0] sm:$0xff]
    %v178 = vld [vmem:[#allocation3 + $0xf8] sm:$0xff]
    %v179 = vld [vmem:[%s5] sm:$0x3]
    %v181 = vlaneseq
    %v182 = vshrl.u32 %v181, 7
    %v183 = vsub.s32 0, %v182
    %v184 = vrot.slane %v179, %v183
    %v185 = vlaneseq
    %v186 = vshrl.u32 %v185, 7
    %v187 = vsub.s32 1, %v186
    %v188 = vrot.slane %v179, %v187
    %v223 = vunpack.c.l.b16 %v147
    %v224 = vunpack.c.h.b16 %v147
    %v225 = vunpack.c.l.b16 %v148
    %v226 = vunpack.c.h.b16 %v148
    %v227 = vunpack.c.l.b16 %v149
    %v228 = vunpack.c.h.b16 %v149
    %v229 = vunpack.c.l.b16 %v150
    %v230 = vunpack.c.h.b16 %v150
    %v231 = vunpack.c.l.b16 %v151
    %v232 = vunpack.c.h.b16 %v151
    %v233 = vunpack.c.l.b16 %v152
    %v234 = vunpack.c.h.b16 %v152
    %v235 = vunpack.c.l.b16 %v153
    %v236 = vunpack.c.h.b16 %v153
    %v237 = vunpack.c.l.b16 %v154
    %v238 = vunpack.c.h.b16 %v154
    %v239 = vunpack.c.l.b16 %v155
    %v240 = vunpack.c.h.b16 %v155
    %v241 = vunpack.c.l.b16 %v156
    %v242 = vunpack.c.h.b16 %v156
    %v243 = vunpack.c.l.b16 %v157
    %v244 = vunpack.c.h.b16 %v157
    %v245 = vunpack.c.l.b16 %v158
    %v246 = vunpack.c.h.b16 %v158
    %v247 = vunpack.c.l.b16 %v159
    %v248 = vunpack.c.h.b16 %v159
    %v249 = vunpack.c.l.b16 %v160
    %v250 = vunpack.c.h.b16 %v160
    %v251 = vunpack.c.l.b16 %v161
    %v252 = vunpack.c.h.b16 %v161
    %v253 = vunpack.c.l.b16 %v162
    %v254 = vunpack.c.h.b16 %v162
    %v255 = vunpack.c.l.b16 %v163
    %v256 = vunpack.c.h.b16 %v163
    %v257 = vunpack.c.l.b16 %v164
    %v258 = vunpack.c.h.b16 %v164
    %v259 = vunpack.c.l.b16 %v165
    %v260 = vunpack.c.h.b16 %v165
    %v261 = vunpack.c.l.b16 %v166
    %v262 = vunpack.c.h.b16 %v166
    %v263 = vunpack.c.l.b16 %v167
    %v264 = vunpack.c.h.b16 %v167
    %v265 = vunpack.c.l.b16 %v168
    %v266 = vunpack.c.h.b16 %v168
    %v267 = vunpack.c.l.b16 %v169
    %v268 = vunpack.c.h.b16 %v169
    %v269 = vunpack.c.l.b16 %v170
    %v270 = vunpack.c.h.b16 %v170
    %v271 = vunpack.c.l.b16 %v171
    %v272 = vunpack.c.h.b16 %v171
    %v273 = vunpack.c.l.b16 %v172
    %v274 = vunpack.c.h.b16 %v172
    %v275 = vunpack.c.l.b16 %v173
    %v276 = vunpack.c.h.b16 %v173
    %v277 = vunpack.c.l.b16 %v174
    %v278 = vunpack.c.h.b16 %v174
    %v279 = vunpack.c.l.b16 %v175
    %v280 = vunpack.c.h.b16 %v175
    %v281 = vunpack.c.l.b16 %v176
    %v282 = vunpack.c.h.b16 %v176
    %v283 = vunpack.c.l.b16 %v177
    %v284 = vunpack.c.h.b16 %v177
    %v285 = vunpack.c.l.b16 %v178
    %v286 = vunpack.c.h.b16 %v178
    %v287 = vpack.c.b16 %v225, %v223
    %v288 = vpack.c.b16 %v226, %v224
    %v289 = vpack.c.b16 %v229, %v227
    %v290 = vpack.c.b16 %v230, %v228
    %v291 = vpack.c.b16 %v233, %v231
    %v292 = vpack.c.b16 %v234, %v232
    %v293 = vpack.c.b16 %v237, %v235
    %v294 = vpack.c.b16 %v238, %v236
    %v295 = vpack.c.b16 %v241, %v239
    %v296 = vpack.c.b16 %v242, %v240
    %v297 = vpack.c.b16 %v245, %v243
    %v298 = vpack.c.b16 %v246, %v244
    %v299 = vpack.c.b16 %v249, %v247
    %v300 = vpack.c.b16 %v250, %v248
    %v301 = vpack.c.b16 %v253, %v251
    %v302 = vpack.c.b16 %v254, %v252
    %v303 = vpack.c.b16 %v257, %v255
    %v304 = vpack.c.b16 %v258, %v256
    %v305 = vpack.c.b16 %v261, %v259
    %v306 = vpack.c.b16 %v262, %v260
    %v307 = vpack.c.b16 %v265, %v263
    %v308 = vpack.c.b16 %v266, %v264
    %v309 = vpack.c.b16 %v269, %v267
    %v310 = vpack.c.b16 %v270, %v268
    %v311 = vpack.c.b16 %v273, %v271
    %v312 = vpack.c.b16 %v274, %v272
    %v313 = vpack.c.b16 %v277, %v275
    %v314 = vpack.c.b16 %v278, %v276
    %v315 = vpack.c.b16 %v281, %v279
    %v316 = vpack.c.b16 %v282, %v280
    %v317 = vpack.c.b16 %v285, %v283
    %v318 = vpack.c.b16 %v286, %v284
    %351 = vmatprep.subr.bf16.mxu0 %v288
    %352 = vmatpush1.bf16.msra.mxu0 %v287
    %353 = vmatprep.subr.bf16.mxu0 %v290
    %354 = vmatpush1.bf16.msra.mxu0 %v289
    %355 = vmatprep.subr.bf16.mxu0 %v292
    %356 = vmatpush1.bf16.msra.mxu0 %v291
    %357 = vmatprep.subr.bf16.mxu0 %v294
    %358 = vmatpush1.bf16.msra.mxu0 %v293
    %359 = vmatprep.subr.bf16.mxu0 %v296
    %360 = vmatpush1.bf16.msra.mxu0 %v295
    %361 = vmatprep.subr.bf16.mxu0 %v298
    %362 = vmatpush1.bf16.msra.mxu0 %v297
    %363 = vmatprep.subr.bf16.mxu0 %v300
    %364 = vmatpush1.bf16.msra.mxu0 %v299
    %365 = vmatprep.subr.bf16.mxu0 %v302
    %366 = vmatpush1.bf16.msra.mxu0 %v301
    %367 = vmatprep.subr.bf16.mxu0 %v304
    %368 = vmatpush1.bf16.msra.mxu0 %v303
    %369 = vmatprep.subr.bf16.mxu0 %v306
    %370 = vmatpush1.bf16.msra.mxu0 %v305
    %371 = vmatprep.subr.bf16.mxu0 %v308
    %372 = vmatpush1.bf16.msra.mxu0 %v307
    %373 = vmatprep.subr.bf16.mxu0 %v310
    %374 = vmatpush1.bf16.msra.mxu0 %v309
    %375 = vmatprep.subr.bf16.mxu0 %v312
    %376 = vmatpush1.bf16.msra.mxu0 %v311
    %377 = vmatprep.subr.bf16.mxu0 %v314
    %378 = vmatpush1.bf16.msra.mxu0 %v313
    %379 = vmatprep.subr.bf16.mxu0 %v316
    %380 = vmatpush1.bf16.msra.mxu0 %v315
    %381 = vmatprep.subr.bf16.mxu0 %v318
    %382 = vmatpush1.bf16.msra.mxu0 %v317
    %383 = vmatprep.mubr.bf16.mxu0 %v146
    %384 = vmatmul.mubr.bf16.gmra.mrb[0].mxu0 %v145
    %v385 = vpop.f32.mrb[0].mxu0
    %v386 = vadd.f32 %v184, %v385
    %v387 = vpop.f32.mrb[0].mxu0
    %v388 = vadd.f32 %v188, %v387
    %v389 = vpop.f32.mrb[0].mxu0
    %v390 = vpop.f32.mrb[0].mxu0
    %391 = vdwg.mxu0
    %v392 = vmax.f32 %v386, 0.0
    %v393 = vmax.f32 %v388, 0.0
    %v394 = vpack.c.bf16 %v392, %v392
    %v395 = vpack.c.bf16 %v393, %v393
    %v396 = vld [vmem:[%s6] sm:$0xf]
    %v397 = vld [vmem:[%s6 + $0x4] sm:$0xf]
    %v398 = vld [vmem:[%s6 + $0x8] sm:$0xf]
    %v399 = vld [vmem:[%s6 + $0xc] sm:$0xf]
    %v400 = vld [vmem:[%s6 + $0x10] sm:$0xf]
    %v401 = vld [vmem:[%s6 + $0x14] sm:$0xf]
    %v402 = vld [vmem:[%s6 + $0x18] sm:$0xf]
    %v403 = vld [vmem:[%s6 + $0x1c] sm:$0xf]
    %v404 = vld [vmem:[%s6 + $0x20] sm:$0xf]
    %v405 = vld [vmem:[%s6 + $0x24] sm:$0xf]
    %v406 = vld [vmem:[%s6 + $0x28] sm:$0xf]
    %v407 = vld [vmem:[%s6 + $0x2c] sm:$0xf]
    %v408 = vld [vmem:[%s6 + $0x30] sm:$0xf]
    %v409 = vld [vmem:[%s6 + $0x34] sm:$0xf]
    %v410 = vld [vmem:[%s6 + $0x38] sm:$0xf]
    %v411 = vld [vmem:[%s6 + $0x3c] sm:$0xf]
    %v412 = vld [vmem:[%s6 + $0x40] sm:$0xf]
    %v413 = vld [vmem:[%s6 + $0x44] sm:$0xf]
    %v414 = vld [vmem:[%s6 + $0x48] sm:$0xf]
    %v415 = vld [vmem:[%s6 + $0x4c] sm:$0xf]
    %v416 = vld [vmem:[%s6 + $0x50] sm:$0xf]
    %v417 = vld [vmem:[%s6 + $0x54] sm:$0xf]
    %v418 = vld [vmem:[%s6 + $0x58] sm:$0xf]
    %v419 = vld [vmem:[%s6 + $0x5c] sm:$0xf]
    %v420 = vld [vmem:[%s6 + $0x60] sm:$0xf]
    %v421 = vld [vmem:[%s6 + $0x64] sm:$0xf]
    %v422 = vld [vmem:[%s6 + $0x68] sm:$0xf]
    %v423 = vld [vmem:[%s6 + $0x6c] sm:$0xf]
    %v424 = vld [vmem:[%s6 + $0x70] sm:$0xf]
    %v425 = vld [vmem:[%s6 + $0x74] sm:$0xf]
    %v426 = vld [vmem:[%s6 + $0x78] sm:$0xf]
    %v427 = vld [vmem:[%s6 + $0x7c] sm:$0xf]
    %v428 = vld [vmem:[%s7] sm:$0x1]
    %v430 = vlaneseq
    %v431 = vshrl.u32 %v430, 7
    %v432 = vsub.s32 0, %v431
    %v433 = vrot.slane %v428, %v432
    %v467 = vunpack.c.l.b16 %v396
    %v468 = vunpack.c.l.b16 %v397
    %v469 = vunpack.c.l.b16 %v398
    %v470 = vunpack.c.l.b16 %v399
    %v471 = vunpack.c.l.b16 %v400
    %v472 = vunpack.c.l.b16 %v401
    %v473 = vunpack.c.l.b16 %v402
    %v474 = vunpack.c.l.b16 %v403
    %v475 = vunpack.c.l.b16 %v404
    %v476 = vunpack.c.l.b16 %v405
    %v477 = vunpack.c.l.b16 %v406
    %v478 = vunpack.c.l.b16 %v407
    %v479 = vunpack.c.l.b16 %v408
    %v480 = vunpack.c.l.b16 %v409
    %v481 = vunpack.c.l.b16 %v410
    %v482 = vunpack.c.l.b16 %v411
    %v483 = vunpack.c.l.b16 %v412
    %v484 = vunpack.c.l.b16 %v413
    %v485 = vunpack.c.l.b16 %v414
    %v486 = vunpack.c.l.b16 %v415
    %v487 = vunpack.c.l.b16 %v416
    %v488 = vunpack.c.l.b16 %v417
    %v489 = vunpack.c.l.b16 %v418
    %v490 = vunpack.c.l.b16 %v419
    %v491 = vunpack.c.l.b16 %v420
    %v492 = vunpack.c.l.b16 %v421
    %v493 = vunpack.c.l.b16 %v422
    %v494 = vunpack.c.l.b16 %v423
    %v495 = vunpack.c.l.b16 %v424
    %v496 = vunpack.c.l.b16 %v425
    %v497 = vunpack.c.l.b16 %v426
    %v498 = vunpack.c.l.b16 %v427
    %v499 = vpack.c.b16 %v468, %v467
    %v500 = vpack.c.b16 %v470, %v469
    %v501 = vpack.c.b16 %v472, %v471
    %v502 = vpack.c.b16 %v474, %v473
    %v503 = vpack.c.b16 %v476, %v475
    %v504 = vpack.c.b16 %v478, %v477
    %v505 = vpack.c.b16 %v480, %v479
    %v506 = vpack.c.b16 %v482, %v481
    %v507 = vpack.c.b16 %v484, %v483
    %v508 = vpack.c.b16 %v486, %v485
    %v509 = vpack.c.b16 %v488, %v487
    %v510 = vpack.c.b16 %v490, %v489
    %v511 = vpack.c.b16 %v492, %v491
    %v512 = vpack.c.b16 %v494, %v493
    %v513 = vpack.c.b16 %v496, %v495
    %v514 = vpack.c.b16 %v498, %v497
    %531 = vmatprep.subr.bf16.mxu0 0
    %532 = vmatpush1.bf16.msra.mxu0 %v499
    %533 = vmatprep.subr.bf16.mxu0 0
    %534 = vmatpush1.bf16.msra.mxu0 %v500
    %535 = vmatprep.subr.bf16.mxu0 0
    %536 = vmatpush1.bf16.msra.mxu0 %v501
    %537 = vmatprep.subr.bf16.mxu0 0
    %538 = vmatpush1.bf16.msra.mxu0 %v502
    %539 = vmatprep.subr.bf16.mxu0 0
    %540 = vmatpush1.bf16.msra.mxu0 %v503
    %541 = vmatprep.subr.bf16.mxu0 0
    %542 = vmatpush1.bf16.msra.mxu0 %v504
    %543 = vmatprep.subr.bf16.mxu0 0
    %544 = vmatpush1.bf16.msra.mxu0 %v505
    %545 = vmatprep.subr.bf16.mxu0 0
    %546 = vmatpush1.bf16.msra.mxu0 %v506
    %547 = vmatprep.subr.bf16.mxu0 0
    %548 = vmatpush1.bf16.msra.mxu0 %v507
    %549 = vmatprep.subr.bf16.mxu0 0
    %550 = vmatpush1.bf16.msra.mxu0 %v508
    %551 = vmatprep.subr.bf16.mxu0 0
    %552 = vmatpush1.bf16.msra.mxu0 %v509
    %553 = vmatprep.subr.bf16.mxu0 0
    %554 = vmatpush1.bf16.msra.mxu0 %v510
    %555 = vmatprep.subr.bf16.mxu0 0
    %556 = vmatpush1.bf16.msra.mxu0 %v511
    %557 = vmatprep.subr.bf16.mxu0 0
    %558 = vmatpush1.bf16.msra.mxu0 %v512
    %559 = vmatprep.subr.bf16.mxu0 0
    %560 = vmatpush1.bf16.msra.mxu0 %v513
    %561 = vmatprep.subr.bf16.mxu0 0
    %562 = vmatpush1.bf16.msra.mxu0 %v514
    %563 = vmatprep.mubr.bf16.mxu0 %v395
    %564 = vmatmul.mubr.bf16.gmra.mrb[0].mxu0 %v394
    %v565 = vpop.f32.mrb[0].mxu0
    %v566 = vadd.f32 %v433, %v565
    %v567 = vpop.f32.mrb[0].mxu0
    %v568 = vpop.f32.mrb[0].mxu0
    %v569 = vpop.f32.mrb[0].mxu0
    %570 = vdwg.mxu0
    %v571 = vtanh.pop %v566
    %v572 = vstv %s46
    %v573 = vmul.f32 %v571, %v572
    %vm574 = vcmask 64512
    %575 = vst.msk [vmem:[#allocation6] sm:$0xff] %vm574, %v573
    // Predicated region
    $region38: #{actor_forward.1} parent=1 // pred_check
      _
    $region39: #{actor_forward.1} parent=1 // pred_check_branch
      %577 = sbr.rel (0) target = $region41
    $region40: #{actor_forward.1} parent=1 // pred_region
      %s579 = ssub.s32 128, 32
      %580 = vsyncadd [#allocation5], %s579
      %s581 = sshll.u32 [#allocation6], 4
      %s582 = int_to_ptr.vmem [resolvable:$true] %s581
      %587 = dma.vmem_to_hbm [thread:$0]  %s582, 32, %s8, [#allocation5], 32, 32, 2
    $region41: #{actor_forward.1} parent=1 // pred_fallthru
      _
    // Predicated region
    $region42: #{actor_forward.1} parent=1 // pred_check
      _
    $region43: #{actor_forward.1} parent=1 // pred_check_branch
      %589 = sbr.rel (0) target = $region45
    $region44: #{actor_forward.1} parent=1 // pred_region
      %590 = dma.done [#allocation5], 128
    $region45: #{actor_forward.1} parent=1 // pred_fallthru
      _
    %591 = vsyncpa [#allocation4], 1
    %592 = vsyncpa [#allocation5], 1

</llo_original>
